<compile_context>
chip_gen: v6e
topology: v6e:2x2x1
jax: 0.10.0
libtpu: 0.0.40
codegen_flags: <defaults>
</compile_context>

<pallas_src>
import jax
import jax.numpy as jnp
from jax.experimental import pallas as pl
from jax.experimental.pallas import tpu as pltpu

_EPS = 1e-6       # nn.PairwiseDistance default eps (added to the difference)
_LANES = 128
_SUBLANES = 8


def _reference(pred, target):
    """Pure-JAX reference (also the tiny-input fast path)."""
    p = pred.reshape(-1, pred.shape[-1]).astype(jnp.float32)
    t = target.reshape(-1, target.shape[-1]).astype(jnp.float32)
    d = p - t + _EPS
    dist = jnp.sqrt(jnp.sum(d * d, axis=-1))
    return jnp.sum(dist) / p.shape[0]


def _make_euclid_kernel(c):
    """Kernel over one (C, TS, 128) block of pre-diffed rows (rows on sublane x lane)."""

    def kernel(diff_ref, out_ref):
        # Per-channel accumulation: never materializes the full (C, TS, 128)
        # temporary; at most one (TS, 128) f32 tile live at a time.
        ssq = None
        for k in range(c):                                  # tiny static unroll (c == 3)
            dk = diff_ref[k].astype(jnp.float32) + _EPS     # (TS, 128)   VPU
            sq = dk * dk                                    # (TS, 128)   VPU
            ssq = sq if ssq is None else ssq + sq           # (TS, 128)   VPU
        dist = jnp.sqrt(ssq)                                # (TS, 128)   EUP (free slot)

        # One lane-dense (1, 128) partial per block (unmasked full-lane store);
        # the cheap cross-lane finish + padded-row correction happen in the wrapper.
        out_ref[0] = jnp.sum(dist, axis=0, keepdims=True)

    return kernel


def euclidean_loss(pred, target, *, block_sublanes=2048, min_rows_for_kernel=65536):
    """pred, target: (b, n, c) float arrays. Returns scalar float32 loss."""
    b, n, c = pred.shape
    N = b * n

    if N < min_rows_for_kernel:
        # pallas_call launch + pipeline prologue/epilogue plus the wrapper relayout
        # is ~us-scale; for small inputs the fused XLA path wins outright.
        return _reference(pred, target)

    # Pre-diff in plain XLA (elementwise; fuses with the pad/transpose below).
    # Keeps the input dtype: feeding bf16 inputs halves HBM traffic (biggest
    # lever on v5e/v6e); the kernel upcasts to f32 for the math.
    diff = (pred - target).reshape(N, c)

    # Block sizing: TS sublanes x 128 lanes of rows per grid step.
    block_sublanes = max(_SUBLANES, (block_sublanes // _SUBLANES) * _SUBLANES)
    s_needed = pl.cdiv(N, _LANES)
    s_rounded = pl.cdiv(s_needed, _SUBLANES) * _SUBLANES
    ts = min(block_sublanes, s_rounded)
    n_blocks = pl.cdiv(s_rounded, ts)
    if n_blocks == 1 and s_rounded >= 2 * _SUBLANES:
        # v7x has 2 TensorCores; make sure the "parallel" grid axis has >= 2
        # blocks so both cores (and both HBM ports) get work. Neutral on v5e/v6e.
        ts = pl.cdiv(pl.cdiv(s_rounded, 2), _SUBLANES) * _SUBLANES
        n_blocks = pl.cdiv(s_rounded, ts)

    block_rows = ts * _LANES
    n_pad_rows = n_blocks * block_rows
    pad = n_pad_rows - N
    if pad:
        diff = jnp.pad(diff, ((0, pad), (0, 0)))            # padded rows -> diff == 0

    # Lane-dense relayout (single tensor): (N_pad, C) -> (C, S, 128), row = s*128 + l.
    s_total = n_pad_rows // _LANES                           # = n_blocks * ts
    diff_l = diff.T.reshape(c, s_total, _LANES)

    partials = pl.pallas_call(
        _make_euclid_kernel(c),
        out_shape=jax.ShapeDtypeStruct((n_blocks, 1, _LANES), jnp.float32),
        grid_spec=pltpu.PrefetchScalarGridSpec(
            num_scalar_prefetch=0,
            grid=(n_blocks,),
            in_specs=[pl.BlockSpec((c, ts, _LANES), lambda j: (0, j, 0))],
            out_specs=pl.BlockSpec((1, 1, _LANES), lambda j: (j, 0, 0)),
        ),
        compiler_params=pltpu.CompilerParams(
            # Independent per-block partials -> axis sharded across v7x's 2 TCs.
            dimension_semantics=("parallel",),
            # Single pre-diffed input: (3, 2048, 128) f32 block ~3.1 MiB, ~6.3 MiB
            # double-buffered -> comfortably under 32 MiB on every generation
            # (and well under half of v7x's 64 MiB physical VMEM).
            vmem_limit_bytes=32 * 1024 * 1024,
        ),
    )(diff_l)

    total = jnp.sum(partials)
    if pad:
        # Exact correction for padded rows: each padded row has diff == 0, so it
        # contributes sqrt(sum_k eps^2) = sqrt(c)*eps to the sum (computed here in
        # f32 to match the kernel's arithmetic exactly).
        e = jnp.float32(_EPS)
        total = total - jnp.float32(pad) * jnp.sqrt(jnp.float32(c) * e * e)

    loss = total / jnp.float32(N)
    # TODO(synk): the original module calls pdb.set_trace(); no kernel equivalent.
    return loss


if __name__ == "__main__":
    key = jax.random.PRNGKey(0)
    ks = jax.random.split(key, 6)
    checks = []

    # 1) kernel path (forced), 2 blocks via the v7x >=2-block rule: N = 2048, c = 3
    b, n, c = 2, 1024, 3
    pred = jax.random.normal(ks[0], (b, n, c), dtype=jnp.float32)
    target = jax.random.normal(ks[1], (b, n, c), dtype=jnp.float32)
    loss1 = jax.block_until_ready(euclidean_loss(pred, target, min_rows_for_kernel=0))
    checks.append((loss1, _reference(pred, target)))

    # 2) kernel path with small blocks -> longer grid, exercises the "parallel" axis
    loss2 = jax.block_until_ready(
        euclidean_loss(pred, target, block_sublanes=8, min_rows_for_kernel=0))
    checks.append((loss2, _reference(pred, target)))

    # 3) kernel path with ragged N -> wrapper padding + exact scalar correction
    b3, n3, c3 = 3, 813, 3
    pred3 = jax.random.normal(ks[2], (b3, n3, c3), dtype=jnp.float32)
    target3 = jax.random.normal(ks[3], (b3, n3, c3), dtype=jnp.float32)
    loss3 = jax.block_until_ready(euclidean_loss(pred3, target3, min_rows_for_kernel=0))
    checks.append((loss3, _reference(pred3, target3)))

    # 4) tiny input -> pure-JAX fast path (default min_rows_for_kernel)
    b4, n4, c4 = 2, 8, 3
    pred4 = jax.random.normal(ks[4], (b4, n4, c4), dtype=jnp.float32)
    target4 = jax.random.normal(ks[5], (b4, n4, c4), dtype=jnp.float32)
    loss4 = jax.block_until_ready(euclidean_loss(pred4, target4))
    checks.append((loss4, _reference(pred4, target4)))

    for got, ref in checks:
        assert jnp.allclose(got, ref, rtol=3e-5, atol=1e-5), (got, ref)
    print("KERNEL_OK")
</pallas_src>

<mosaic_0001>
module attributes {stable_mosaic.version = 11 : i64} {
  func.func @kernel(%arg0: i32, %arg1: memref<3x8x128xf32, #tpu.memory_space<vmem>>, %arg2: memref<1x1x128xf32, #tpu.memory_space<vmem>>) attributes {dimension_semantics = [#tpu.dimension_semantics<parallel>], iteration_bounds = array<i64: 2>, scalar_prefetch = 0 : i64, scratch_operands = 0 : i64, tpu.core_type = #tpu.core_type<tc>, window_params = [{transform_indices = @transform_0, window_bounds = array<i64: 3, 8, 128>}, {transform_indices = @transform_1, window_bounds = array<i64: 1, 1, 128>}]} {
    %c0 = arith.constant 0 : index
    %c0_0 = arith.constant 0 : index
    %c0_1 = arith.constant 0 : index
    %0 = vector.load %arg1[%c0, %c0_0, %c0_1] : memref<3x8x128xf32, #tpu.memory_space<vmem>>, vector<1x8x128xf32>
    %1 = vector.shape_cast %0 : vector<1x8x128xf32> to vector<8x128xf32>
    %cst = arith.constant 9.99999997E-7 : f32
    %2 = vector.broadcast %cst : f32 to vector<8x128xf32>
    %3 = arith.addf %1, %2 : vector<8x128xf32>
    %4 = arith.mulf %3, %3 : vector<8x128xf32>
    %c1 = arith.constant 1 : index
    %c0_2 = arith.constant 0 : index
    %c0_3 = arith.constant 0 : index
    %5 = vector.load %arg1[%c1, %c0_2, %c0_3] : memref<3x8x128xf32, #tpu.memory_space<vmem>>, vector<1x8x128xf32>
    %6 = vector.shape_cast %5 : vector<1x8x128xf32> to vector<8x128xf32>
    %cst_4 = arith.constant 9.99999997E-7 : f32
    %7 = vector.broadcast %cst_4 : f32 to vector<8x128xf32>
    %8 = arith.addf %6, %7 : vector<8x128xf32>
    %9 = arith.mulf %8, %8 : vector<8x128xf32>
    %10 = arith.addf %4, %9 : vector<8x128xf32>
    %c2 = arith.constant 2 : index
    %c0_5 = arith.constant 0 : index
    %c0_6 = arith.constant 0 : index
    %11 = vector.load %arg1[%c2, %c0_5, %c0_6] : memref<3x8x128xf32, #tpu.memory_space<vmem>>, vector<1x8x128xf32>
    %12 = vector.shape_cast %11 : vector<1x8x128xf32> to vector<8x128xf32>
    %cst_7 = arith.constant 9.99999997E-7 : f32
    %13 = vector.broadcast %cst_7 : f32 to vector<8x128xf32>
    %14 = arith.addf %12, %13 : vector<8x128xf32>
    %15 = arith.mulf %14, %14 : vector<8x128xf32>
    %16 = arith.addf %10, %15 : vector<8x128xf32>
    %17 = math.sqrt %16 : vector<8x128xf32>
    %cst_8 = arith.constant dense<0.000000e+00> : vector<128xf32>
    %18 = vector.multi_reduction <add>, %17, %cst_8 [0] : vector<8x128xf32> to vector<128xf32>
    %19 = vector.shape_cast %18 : vector<128xf32> to vector<1x128xf32>
    %c0_9 = arith.constant 0 : index
    %c0_10 = arith.constant 0 : index
    %c0_11 = arith.constant 0 : index
    %20 = vector.load %arg2[%c0_9, %c0_10, %c0_11] : memref<1x1x128xf32, #tpu.memory_space<vmem>>, vector<1x1x128xf32>
    %21 = vector.shape_cast %20 : vector<1x1x128xf32> to vector<1x128xf32>
    %22 = vector.shape_cast %19 : vector<1x128xf32> to vector<1x1x128xf32>
    tpu.vector_store %arg2[%c0_9, %c0_10, %c0_11], %22 {strides = array<i32>} : memref<1x1x128xf32, #tpu.memory_space<vmem>>, vector<1x1x128xf32>,
    return
  }
  func.func @transform_0(%arg0: i32) -> (i32, i32, i32) {
    %c0_i32 = arith.constant 0 : i32
    %c0_i32_0 = arith.constant 0 : i32
    %c0_i32_1 = arith.constant 0 : i32
    return %c0_i32, %arg0, %c0_i32_0 : i32, i32, i32
  }
  func.func @transform_1(%arg0: i32) -> (i32, i32, i32) {
    %c0_i32 = arith.constant 0 : i32
    %c0_i32_0 = arith.constant 0 : i32
    %c0_i32_1 = arith.constant 0 : i32
    return %arg0, %c0_i32, %c0_i32_0 : i32, i32, i32
  }
}

</mosaic_0001>

<llo_original>
// kernel: tpu_custom_call.1
$region0: #{tpu_custom_call.1}
  #allocation0 [shape = 'u32[]', space=smem, size = 0x4, offset = 0x4, fixed_abs, tag = 'smem constant byte address 0x4 - core index']
  #allocation1 [shape = 'u32[144,128]{1,0:T(1,128)}', space=vmem, size = 0x12000, scoped, tag = 'internal scratch']
  %s0 = inlined_call_operand.hbm [shape: f32[3,16,128], index: 0, kind: input, shape index: {}]
  %s1 = inlined_call_operand.hbm [shape: f32[2,1,128], index: 1, kind: output, shape index: {}]
  %s2 = sld [smem:[#allocation0]]
  $region41: #{tpu_custom_call.1} parent=0
    _
  %s4 = ssub.s32 1, %s2
  %s5 = scalar_select 0, %s4, %s2
  $region1: #{tpu_custom_call.1} parent=0
    #allocation2 [shape = 'u8[24576]{0}', space=vmem, size = 0x6000, scoped, tag = 'input window, operand 0']
    #allocation3 [shape = 's32[2]{0}', space=sflag, size = 0x8, scoped, tag = 'scoped memory for tpu_custom_call.1']
    #allocation4 [shape = 's32[2]{0}', space=sflag, size = 0x8, scoped, tag = 'scoped memory for tpu_custom_call.1']
    #allocation5 [shape = 'u8[1024]{0}', space=vmem, size = 0x400, scoped, tag = 'output window, operand 0']
    %6 = vsyncpa [#allocation3], 0
    %s7 = scalar_lea.sflag [#allocation3], 1
    %8 = vsyncpa %s7, 0
    %9 = vsyncpa [#allocation4], 0
    %s10 = scalar_lea.sflag [#allocation4], 1
    %11 = vsyncpa %s10, 0
    loop: start=0, step=1, limit=4
    $region2: #{tpu_custom_call.1} parent=1 // loop_pre_header
      _
    $region3: #{tpu_custom_call.1} parent=1 // loop_header
      %s13 = sphi 0, %s17
      %p14 = scmp.ge.s32.totalorder %s13, 4
      %s23 = sphi 0, %s25
      %s26 = sphi 0, %s23
      %s27 = sphi 0, %s26
      %s43 = sphi 0, %s27
      %s49 = sphi 0, %s51
      %s52 = sphi 0, %s49
      %s53 = sphi 0, %s52
      %s69 = sphi 0, %s53
    $region4: #{tpu_custom_call.1} parent=1 // loop_header_branch
      %16 = sbr.rel (%p14) target = $region8
    $region5: #{tpu_custom_call.1} parent=1 // loop_body
      %s18 = ssub.s32 %s13, 1
      %s19 = ssub.s32 %s13, 2
      %s20 = sadd.s32 %s13, 1
      %s21 = ssub.s32 %s13, %s20
      %p22 = scmp.eq.s32.totalorder %s21, 0
      %s24 = sadd.s32 %s23, 1
      %s25 = scalar_select %p22, %s23, %s24
      %p28 = pneg %p22
      %p29 = scmp.eq.s32.totalorder %s13, 1
      %p30 = por %p28, %p29
      %p31 = scmp.ne.s32.totalorder %s23, %s26
      %p32 = scmp.eq.s32.totalorder %s13, 0
      %p33 = por %p31, %p32
      %p34 = scmp.ne.s32.totalorder %s23, %s26
      %p35 = scmp.eq.s32.totalorder %s18, 1
      %p36 = por %p34, %p35
      %p37 = scmp.ne.s32.totalorder %s26, %s27
      %p38 = scmp.eq.s32.totalorder %s18, 0
      %p39 = por %p37, %p38
      %p40 = scmp.ne.s32.totalorder %s26, %s27
      %p41 = scmp.eq.s32.totalorder %s19, 1
      %p42 = por %p40, %p41
      %p44 = scmp.ne.s32.totalorder %s27, %s43
      %p45 = scmp.eq.s32.totalorder %s19, 0
      %p46 = por %p44, %p45
      %s47 = ssub.s32 %s13, %s20
      %p48 = scmp.eq.s32.totalorder %s47, 0
      %s50 = sadd.s32 %s49, 1
      %s51 = scalar_select %p48, %s49, %s50
      %p54 = pneg %p48
      %p55 = scmp.eq.s32.totalorder %s13, 1
      %p56 = por %p54, %p55
      %p57 = scmp.ne.s32.totalorder %s49, %s52
      %p58 = scmp.eq.s32.totalorder %s13, 0
      %p59 = por %p57, %p58
      %p60 = scmp.ne.s32.totalorder %s49, %s52
      %p61 = scmp.eq.s32.totalorder %s18, 1
      %p62 = por %p60, %p61
      %p63 = scmp.ne.s32.totalorder %s52, %s53
      %p64 = scmp.eq.s32.totalorder %s18, 0
      %p65 = por %p63, %p64
      %p66 = scmp.ne.s32.totalorder %s52, %s53
      %p67 = scmp.eq.s32.totalorder %s19, 1
      %p68 = por %p66, %p67
      %p70 = scmp.ne.s32.totalorder %s53, %s69
      %p71 = scmp.eq.s32.totalorder %s19, 0
      %p72 = por %p70, %p71
      %p73 = scmp.le.s32.totalorder 1, %s13
      %p74 = scmp.lt.s32.totalorder %s13, 3
      %p75 = pnand %p73, %p74
      %p76 = pneg %p75
      // Predicated region
      $region9: #{tpu_custom_call.1} parent=5 // pred_check
        _
      $region10: #{tpu_custom_call.1} parent=5 // pred_check_branch
        %78 = sbr.rel (%p75) target = $region12
      $region11: #{tpu_custom_call.1} parent=5 // pred_region
        %s79 = ssub.s32 %s13, 1
      $region12: #{tpu_custom_call.1} parent=5 // pred_fallthru
        _
      %p80 = scmp.lt.s32.totalorder %s13, 2
      // Predicated region
      $region13: #{tpu_custom_call.1} parent=5 // pred_check
        %p81 = pneg %p80
      $region14: #{tpu_custom_call.1} parent=5 // pred_check_branch
        %83 = sbr.rel (%p81) target = $region16
      $region15: #{tpu_custom_call.1} parent=5 // pred_region
        // Predicated region
        $region17: #{tpu_custom_call.1} parent=15 // pred_check
          %p84 = pneg %p33
        $region18: #{tpu_custom_call.1} parent=15 // pred_check_branch
          %86 = sbr.rel (%p84) target = $region20
        $region19: #{tpu_custom_call.1} parent=15 // pred_region
          %s87 = sand.u32 %s23, 1
          %s88 = scalar_lea.sflag [#allocation3], %s87
          %s89 = sand.u32 %s23, 1
          %s90 = smul.addr %s89, 24
          %s91 = scalar_lea.vmem [#allocation2], %s90
          %s93 = ssub.s32 384, 384
          %94 = vsyncadd %s88, %s93
          %s95 = smul.addr %s13, 128
          %s96 = scalar_lea.hbm %s0, %s95
          %s97 = sshll.u32 %s91, 4
          %s98 = int_to_ptr.vmem [resolvable:$true] %s97
          %103 = dma.hbm_to_vmem [thread:$0]  %s96, 384, %s98, %s88, 256, 128, 8
        $region20: #{tpu_custom_call.1} parent=15 // pred_fallthru
          _
      $region16: #{tpu_custom_call.1} parent=5 // pred_fallthru
        _
      %p104 = scmp.le.s32.totalorder 1, %s13
      %p105 = scmp.lt.s32.totalorder %s13, 3
      %p106 = pnand %p104, %p105
      %p107 = pneg %p106
      // Predicated region
      $region21: #{tpu_custom_call.1} parent=5 // pred_check
        _
      $region22: #{tpu_custom_call.1} parent=5 // pred_check_branch
        %109 = sbr.rel (%p106) target = $region24
      $region23: #{tpu_custom_call.1} parent=5 // pred_region
        %s110 = ssub.s32 %s13, 1
        %s111 = sand.u32 %s26, 1
        %s112 = scalar_lea.sflag [#allocation3], %s111
        %s113 = sand.u32 %s26, 1
        %s114 = smul.addr %s113, 24
        %s115 = scalar_lea.vmem [#allocation2], %s114
        // Predicated region
        $region25: #{tpu_custom_call.1} parent=23 // pred_check
          %p116 = pneg %p39
        $region26: #{tpu_custom_call.1} parent=23 // pred_check_branch
          %118 = sbr.rel (%p116) target = $region28
        $region27: #{tpu_custom_call.1} parent=23 // pred_region
          %119 = dma.done %s112, 384
        $region28: #{tpu_custom_call.1} parent=23 // pred_fallthru
          _
        %s120 = sand.u32 %s26, 1
        %s121 = scalar_lea.sflag [#allocation3], %s120
        %s122 = sand.u32 %s26, 1
        %s123 = smul.addr %s122, 24
        %s124 = scalar_lea.vmem [#allocation2], %s123
        %p125 = pneg %p39
        %p126 = pneg %p36
        %p127 = pneg %p65
        %p128 = pneg %p62
        %s129 = sand.u32 %s52, 1
        %s130 = scalar_lea.sflag [#allocation4], %s129
        %s131 = sand.u32 %s52, 1
        %s132 = scalar_lea.vmem [#allocation5], %s131
        %v133 = vld [vmem:[%s115] sm:$0xff]
        %v134 = vadd.f32 %v133, 1e-06
        %v135 = vmul.f32 %v134, %v134
        %s136 = scalar_lea.vmem %s115, 8 [#allocation2]
        %v137 = vld [vmem:[%s136] sm:$0xff]
        %v138 = vadd.f32 %v137, 1e-06
        %v139 = vmul.f32 %v138, %v138
        %v140 = vadd.f32 %v135, %v139
        %s141 = scalar_lea.vmem %s115, 16 [#allocation2]
        %v142 = vld [vmem:[%s141] sm:$0xff]
        %v143 = vadd.f32 %v142, 1e-06
        %v144 = vmul.f32 %v143, %v143
        %v145 = vadd.f32 %v140, %v144
        %v146 = vrsqrt.pop %v145
        %v147 = vmul.f32 %v145, %v146
        %vm148 = vcmp.eq.f32.partialorder %v145, inf
        %v149 = vsel %vm148, %v145, %v147
        %vm150 = vcmp.eq.f32.partialorder %v145, 0.0
        %v151 = vand.u32 %v145, 2147483648
        %v152 = vsel %vm150, %v151, %v149
        %v153 = vrot.slane %v152, 4
        %v154 = vadd.f32 %v152, %v153
        %v155 = vrot.slane %v154, 2
        %v156 = vadd.f32 %v154, %v155
        %v157 = vrot.slane %v156, 1
        %v158 = vadd.f32 %v156, %v157
        %159 = vst [vmem:[%s132] sm:$0x1] %v158
        %s160 = sand.u32 %s52, 1
        %s161 = scalar_lea.sflag [#allocation4], %s160
        %s162 = sand.u32 %s52, 1
        %s163 = scalar_lea.vmem [#allocation5], %s162
        // Predicated region
        $region29: #{tpu_custom_call.1} parent=23 // pred_check
          %p164 = pneg %p62
        $region30: #{tpu_custom_call.1} parent=23 // pred_check_branch
          %166 = sbr.rel (%p164) target = $region32
        $region31: #{tpu_custom_call.1} parent=23 // pred_region
          %s168 = ssub.s32 16, 16
          %169 = vsyncadd %s161, %s168
          %s170 = smul.addr %s18, 16
          %s171 = scalar_lea.hbm %s1, %s170
          %s173 = sshll.u32 %s163, 4
          %s174 = int_to_ptr.vmem [resolvable:$true] %s173
          %176 = dma.vmem_to_hbm [thread:$0]  %s174, 16, %s171, %s161
        $region32: #{tpu_custom_call.1} parent=23 // pred_fallthru
          _
      $region24: #{tpu_custom_call.1} parent=5 // pred_fallthru
        _
      %p177 = scmp.le.s32.totalorder 2, %s13
      // Predicated region
      $region33: #{tpu_custom_call.1} parent=5 // pred_check
        %p178 = pneg %p177
      $region34: #{tpu_custom_call.1} parent=5 // pred_check_branch
        %180 = sbr.rel (%p178) target = $region36
      $region35: #{tpu_custom_call.1} parent=5 // pred_region
        %s181 = ssub.s32 %s13, 2
        // Predicated region
        $region37: #{tpu_custom_call.1} parent=35 // pred_check
          %p182 = pneg %p68
        $region38: #{tpu_custom_call.1} parent=35 // pred_check_branch
          %184 = sbr.rel (%p182) target = $region40
        $region39: #{tpu_custom_call.1} parent=35 // pred_region
          %s185 = sand.u32 %s53, 1
          %s186 = scalar_lea.sflag [#allocation4], %s185
          %s187 = sand.u32 %s53, 1
          %s188 = scalar_lea.vmem [#allocation5], %s187
          %189 = dma.done %s186, 16
        $region40: #{tpu_custom_call.1} parent=35 // pred_fallthru
          _
      $region36: #{tpu_custom_call.1} parent=5 // pred_fallthru
        _
    $region6: #{tpu_custom_call.1} parent=1 // loop_footer
      %s17 = sadd.s32 1, %s13
    $region7: #{tpu_custom_call.1} parent=1 // loop_footer_branch
      %12 = sbr.rel target = $region3
    $region8: #{tpu_custom_call.1} parent=1 // loop_exit
      _
    %190 = vsyncpa [#allocation3], 1
    %s191 = scalar_lea.sflag [#allocation3], 1
    %192 = vsyncpa %s191, 1
    %193 = vsyncpa [#allocation4], 1
    %s194 = scalar_lea.sflag [#allocation4], 1
    %195 = vsyncpa %s194, 1

</llo_original>
